<compile_context>
chip_gen: v6e
topology: v6e:2x2x1
jax: 0.10.0
libtpu: 0.0.40
codegen_flags: <defaults>
</compile_context>

<pallas_src>
import jax
import jax.numpy as jnp
from jax.experimental import pallas as pl
from jax.experimental.pallas import tpu as pltpu

HIDDEN = 128  # hidden_units in the PyTorch module


def _round_up(n, m):
    return ((n + m - 1) // m) * m


def policy_baseline_kernel(x_ref, w1_ref, w2_ref, w3_ref, b12_ref, b3_ref, out_ref):
    # x_ref:   [Bt, obs]       f32   (raw observations, no padding)
    # w1_ref:  [obs, 128]      bf16
    # w2_ref:  [128, 128]      bf16
    # w3_ref:  [128, OUT_W]    bf16  (cols [0:A] = action head, col [A] = value head)
    # b12_ref: [2, 128]        f32
    # b3_ref:  [1, OUT_W]      f32
    # out_ref: [Bt, OUT_W]     f32
    x = x_ref[...].astype(jnp.bfloat16)
    b12 = b12_ref[...]

    h = jnp.dot(x, w1_ref[...], preferred_element_type=jnp.float32) + b12[0:1]
    h = jnp.maximum(h, 0.0)
    h = jnp.dot(h.astype(jnp.bfloat16), w2_ref[...],
                preferred_element_type=jnp.float32) + b12[1:2]
    h = jnp.maximum(h, 0.0)
    out_ref[...] = (jnp.dot(h.astype(jnp.bfloat16), w3_ref[...],
                            preferred_element_type=jnp.float32) + b3_ref[...])


def policy_baseline_forward(x, params, *, block_b=2048):
    """x: [B, obs_dim] float32. Returns (actions [B, A], value [B, 1])."""
    w1, w2, w3 = params["w1"], params["w2"], params["w3"]
    b12, b3 = params["b12"], params["b3"]
    A = params["action_size"]
    B, obs = x.shape
    out_w = w3.shape[1]

    # Batch tile: multiple of 8 (sublane), capped by block_b; for B >= 16 also
    # capped at ~B/2 so the grid has >= 2 steps (keeps both v7x TCs busy).
    bt = min(block_b, _round_up(B, 8))
    if B >= 16:
        bt = min(bt, _round_up(pl.cdiv(B, 2), 8))
    bt = max(8, _round_up(bt, 8))
    grid = (pl.cdiv(B, bt),)

    w_bytes = w1.size * 2 + w2.size * 2 + w3.size * 2 + b12.size * 4 + b3.size * 4
    cost = pl.CostEstimate(
        flops=2 * B * (obs * HIDDEN + HIDDEN * HIDDEN + HIDDEN * out_w),
        transcendentals=0,
        bytes_accessed=B * obs * 4 + B * out_w * 4 + w_bytes,
    )

    out = pl.pallas_call(
        policy_baseline_kernel,
        out_shape=jax.ShapeDtypeStruct((B, out_w), jnp.float32),
        grid_spec=pltpu.PrefetchScalarGridSpec(
            num_scalar_prefetch=0,
            grid=grid,
            in_specs=[
                pl.BlockSpec((bt, obs), lambda i: (i, 0)),         # x tile
                pl.BlockSpec((obs, HIDDEN), lambda i: (0, 0)),     # w1 (resident)
                pl.BlockSpec((HIDDEN, HIDDEN), lambda i: (0, 0)),  # w2 (resident)
                pl.BlockSpec((HIDDEN, out_w), lambda i: (0, 0)),   # fused heads (resident)
                pl.BlockSpec((2, HIDDEN), lambda i: (0, 0)),       # b1|b2 (resident)
                pl.BlockSpec((1, out_w), lambda i: (0, 0)),        # fused head bias
            ],
            out_specs=pl.BlockSpec((bt, out_w), lambda i: (i, 0)),
        ),
        compiler_params=pltpu.CompilerParams(
            dimension_semantics=("parallel",)),
        cost_estimate=cost,
    )(x, w1, w2, w3, b12, b3)

    actions = out[:, :A]
    value = out[:, A:A + 1]
    return actions, value


def init_params(key, obs_dim, action_size):
    """Deterministic init mimicking torch.nn.Linear default (U[-1/sqrt(fan_in), +])."""

    def linear(k, fan_in, fan_out):
        kw, kb = jax.random.split(k)
        bound = 1.0 / jnp.sqrt(fan_in)
        w = jax.random.uniform(kw, (fan_in, fan_out), jnp.float32, -bound, bound)
        b = jax.random.uniform(kb, (fan_out,), jnp.float32, -bound, bound)
        return w, b

    k1, k2, k3, k4 = jax.random.split(key, 4)
    w1, b1 = linear(k1, obs_dim, HIDDEN)
    w2, b2 = linear(k2, HIDDEN, HIDDEN)
    wa, ba = linear(k3, HIDDEN, action_size)
    wv, bv = linear(k4, HIDDEN, 1)

    out_w = max(8, _round_up(action_size + 1, 8))  # narrow fused-head width

    w3 = jnp.zeros((HIDDEN, out_w), jnp.float32)
    w3 = w3.at[:, :action_size].set(wa)
    w3 = w3.at[:, action_size:action_size + 1].set(wv)

    b12 = jnp.stack([b1, b2], axis=0)
    b3 = jnp.zeros((1, out_w), jnp.float32)
    b3 = b3.at[0, :action_size].set(ba)
    b3 = b3.at[0, action_size].set(bv[0])

    # TODO(synk): bf16 weights/activations differ from fp32 torch Linear at ~1e-2;
    # keep weights f32 (and skip the in-kernel cast) if exact fp32 fidelity matters.
    return {
        "w1": w1.astype(jnp.bfloat16),
        "w2": w2.astype(jnp.bfloat16),
        "w3": w3.astype(jnp.bfloat16),
        "b12": b12,
        "b3": b3,
        "action_size": action_size,
    }


def reference_forward(x, params):
    """Pure-JAX reference replicating the kernel's mixed-precision math."""
    A = params["action_size"]
    h = jnp.dot(x.astype(jnp.bfloat16), params["w1"],
                preferred_element_type=jnp.float32) + params["b12"][0]
    h = jnp.maximum(h, 0.0)
    h = jnp.dot(h.astype(jnp.bfloat16), params["w2"],
                preferred_element_type=jnp.float32) + params["b12"][1]
    h = jnp.maximum(h, 0.0)
    out = jnp.dot(h.astype(jnp.bfloat16), params["w3"],
                  preferred_element_type=jnp.float32) + params["b3"][0]
    return out[:, :A], out[:, A:A + 1]


if __name__ == "__main__":
    key = jax.random.PRNGKey(0)
    k_param, k_x = jax.random.split(key)

    B, OBS, ACT = 8, 16, 4          # batch=8, observation=(16,), actions=4
    params = init_params(k_param, OBS, ACT)
    x = jax.random.normal(k_x, (B, OBS), jnp.float32)

    actions, value = policy_baseline_forward(x, params)
    jax.block_until_ready((actions, value))

    ref_actions, ref_value = reference_forward(x, params)
    assert actions.shape == (B, ACT) and value.shape == (B, 1)
    assert jnp.allclose(actions, ref_actions, atol=1e-2, rtol=1e-2)
    assert jnp.allclose(value, ref_value, atol=1e-2, rtol=1e-2)

    print("KERNEL_OK")
</pallas_src>

<mosaic_0001>
module attributes {stable_mosaic.version = 11 : i64} {
  func.func @policy_baseline_kernel(%arg0: i32, %arg1: memref<8x16xf32, #tpu.memory_space<vmem>>, %arg2: memref<16x128xbf16, #tpu.memory_space<vmem>>, %arg3: memref<128x128xbf16, #tpu.memory_space<vmem>>, %arg4: memref<128x8xbf16, #tpu.memory_space<vmem>>, %arg5: memref<2x128xf32, #tpu.memory_space<vmem>>, %arg6: memref<1x8xf32, #tpu.memory_space<vmem>>, %arg7: memref<8x8xf32, #tpu.memory_space<vmem>>) attributes {dimension_semantics = [#tpu.dimension_semantics<parallel>], iteration_bounds = array<i64: 1>, scalar_prefetch = 0 : i64, scratch_operands = 0 : i64, tpu.core_type = #tpu.core_type<tc>, window_params = [{transform_indices = @transform_0, window_bounds = array<i64: 8, 16>}, {pipeline_mode = #tpu.pipeline_mode<synchronous>, transform_indices = @transform_1, window_bounds = array<i64: 16, 128>}, {pipeline_mode = #tpu.pipeline_mode<synchronous>, transform_indices = @transform_2, window_bounds = array<i64: 128, 128>}, {pipeline_mode = #tpu.pipeline_mode<synchronous>, transform_indices = @transform_3, window_bounds = array<i64: 128, 8>}, {pipeline_mode = #tpu.pipeline_mode<synchronous>, transform_indices = @transform_4, window_bounds = array<i64: 2, 128>}, {pipeline_mode = #tpu.pipeline_mode<synchronous>, transform_indices = @transform_5, window_bounds = array<i64: 1, 8>}, {transform_indices = @transform_6, window_bounds = array<i64: 8, 8>}]} {
    %c0 = arith.constant 0 : index
    %c0_0 = arith.constant 0 : index
    %0 = vector.load %arg1[%c0, %c0_0] : memref<8x16xf32, #tpu.memory_space<vmem>>, vector<8x16xf32>
    %1 = arith.truncf %0 : vector<8x16xf32> to vector<8x16xbf16>
    %c0_1 = arith.constant 0 : index
    %c0_2 = arith.constant 0 : index
    %2 = vector.load %arg5[%c0_1, %c0_2] : memref<2x128xf32, #tpu.memory_space<vmem>>, vector<2x128xf32>
    %c0_3 = arith.constant 0 : index
    %c0_4 = arith.constant 0 : index
    %3 = vector.load %arg2[%c0_3, %c0_4] : memref<16x128xbf16, #tpu.memory_space<vmem>>, vector<16x128xbf16>
    %cst = arith.constant dense<0.000000e+00> : vector<8x128xf32>
    %4 = tpu.matmul %1, %3, %cst {dimension_numbers = #tpu.dot_dimension_numbers<[1], [0], [0], [1], [0, 0, 1, 1], [], []>} : vector<8x16xbf16>, vector<16x128xbf16>, vector<8x128xf32> -> vector<8x128xf32>
    %5 = vector.extract_strided_slice %2 {offsets = [0, 0], sizes = [1, 128], strides = [1, 1]} : vector<2x128xf32> to vector<1x128xf32>
    %6 = vector.broadcast %5 : vector<1x128xf32> to vector<8x128xf32>
    %7 = arith.addf %4, %6 : vector<8x128xf32>
    %cst_5 = arith.constant 0.000000e+00 : f32
    %8 = vector.broadcast %cst_5 : f32 to vector<8x128xf32>
    %9 = arith.maximumf %7, %8 : vector<8x128xf32>
    %10 = arith.truncf %9 : vector<8x128xf32> to vector<8x128xbf16>
    %c0_6 = arith.constant 0 : index
    %c0_7 = arith.constant 0 : index
    %11 = vector.load %arg3[%c0_6, %c0_7] : memref<128x128xbf16, #tpu.memory_space<vmem>>, vector<128x128xbf16>
    %cst_8 = arith.constant dense<0.000000e+00> : vector<8x128xf32>
    %12 = tpu.matmul %10, %11, %cst_8 {dimension_numbers = #tpu.dot_dimension_numbers<[1], [0], [0], [1], [0, 0, 1, 1], [], []>} : vector<8x128xbf16>, vector<128x128xbf16>, vector<8x128xf32> -> vector<8x128xf32>
    %13 = vector.extract_strided_slice %2 {offsets = [1, 0], sizes = [1, 128], strides = [1, 1]} : vector<2x128xf32> to vector<1x128xf32>
    %14 = vector.broadcast %13 : vector<1x128xf32> to vector<8x128xf32>
    %15 = arith.addf %12, %14 : vector<8x128xf32>
    %cst_9 = arith.constant 0.000000e+00 : f32
    %16 = vector.broadcast %cst_9 : f32 to vector<8x128xf32>
    %17 = arith.maximumf %15, %16 : vector<8x128xf32>
    %18 = arith.truncf %17 : vector<8x128xf32> to vector<8x128xbf16>
    %c0_10 = arith.constant 0 : index
    %c0_11 = arith.constant 0 : index
    %19 = vector.load %arg4[%c0_10, %c0_11] : memref<128x8xbf16, #tpu.memory_space<vmem>>, vector<128x8xbf16>
    %cst_12 = arith.constant dense<0.000000e+00> : vector<8x8xf32>
    %20 = tpu.matmul %18, %19, %cst_12 {dimension_numbers = #tpu.dot_dimension_numbers<[1], [0], [0], [1], [0, 0, 1, 1], [], []>} : vector<8x128xbf16>, vector<128x8xbf16>, vector<8x8xf32> -> vector<8x8xf32>
    %c0_13 = arith.constant 0 : index
    %c0_14 = arith.constant 0 : index
    %21 = vector.load %arg6[%c0_13, %c0_14] : memref<1x8xf32, #tpu.memory_space<vmem>>, vector<1x8xf32>
    %22 = vector.broadcast %21 : vector<1x8xf32> to vector<8x8xf32>
    %23 = arith.addf %20, %22 : vector<8x8xf32>
    %c0_15 = arith.constant 0 : index
    %c0_16 = arith.constant 0 : index
    %24 = vector.load %arg7[%c0_15, %c0_16] : memref<8x8xf32, #tpu.memory_space<vmem>>, vector<8x8xf32>
    tpu.vector_store %arg7[%c0_15, %c0_16], %23 {strides = array<i32>} : memref<8x8xf32, #tpu.memory_space<vmem>>, vector<8x8xf32>,
    return
  }
  func.func @transform_0(%arg0: i32) -> (i32, i32) {
    %c0_i32 = arith.constant 0 : i32
    %c0_i32_0 = arith.constant 0 : i32
    return %arg0, %c0_i32 : i32, i32
  }
  func.func @transform_1(%arg0: i32) -> (i32, i32) {
    %c0_i32 = arith.constant 0 : i32
    %c0_i32_0 = arith.constant 0 : i32
    %c0_i32_1 = arith.constant 0 : i32
    return %c0_i32, %c0_i32_0 : i32, i32
  }
  func.func @transform_2(%arg0: i32) -> (i32, i32) {
    %c0_i32 = arith.constant 0 : i32
    %c0_i32_0 = arith.constant 0 : i32
    %c0_i32_1 = arith.constant 0 : i32
    return %c0_i32, %c0_i32_0 : i32, i32
  }
  func.func @transform_3(%arg0: i32) -> (i32, i32) {
    %c0_i32 = arith.constant 0 : i32
    %c0_i32_0 = arith.constant 0 : i32
    %c0_i32_1 = arith.constant 0 : i32
    return %c0_i32, %c0_i32_0 : i32, i32
  }
  func.func @transform_4(%arg0: i32) -> (i32, i32) {
    %c0_i32 = arith.constant 0 : i32
    %c0_i32_0 = arith.constant 0 : i32
    %c0_i32_1 = arith.constant 0 : i32
    return %c0_i32, %c0_i32_0 : i32, i32
  }
  func.func @transform_5(%arg0: i32) -> (i32, i32) {
    %c0_i32 = arith.constant 0 : i32
    %c0_i32_0 = arith.constant 0 : i32
    %c0_i32_1 = arith.constant 0 : i32
    return %c0_i32, %c0_i32_0 : i32, i32
  }
  func.func @transform_6(%arg0: i32) -> (i32, i32) {
    %c0_i32 = arith.constant 0 : i32
    %c0_i32_0 = arith.constant 0 : i32
    return %arg0, %c0_i32 : i32, i32
  }
}

</mosaic_0001>

<llo_original>
// kernel: tpu_custom_call.1
$region0: #{tpu_custom_call.1}
  #allocation0 [shape = 'u32[]', space=smem, size = 0x4, offset = 0x4, fixed_abs, tag = 'smem constant byte address 0x4 - core index']
  #allocation1 [shape = 'u32[144,128]{1,0:T(1,128)}', space=vmem, size = 0x12000, scoped, tag = 'internal scratch']
  %s0 = inlined_call_operand.hbm [shape: f32[8,16], index: 0, kind: input, shape index: {}]
  %s1 = inlined_call_operand.hbm [shape: bf16[16,128], index: 1, kind: input, shape index: {}]
  %s2 = inlined_call_operand.vmem [shape: bf16[128,128], index: 2, kind: input, shape index: {}]
  %s3 = inlined_call_operand.vmem [shape: bf16[128,8], index: 3, kind: input, shape index: {}]
  %s4 = inlined_call_operand.vmem [shape: f32[2,128], index: 4, kind: input, shape index: {}]
  %s5 = inlined_call_operand.vmem [shape: f32[1,8], index: 5, kind: input, shape index: {}]
  %s6 = inlined_call_operand.hbm [shape: f32[8,8], index: 6, kind: output, shape index: {}]
  %s7 = sld [smem:[#allocation0]]
  $region42: #{tpu_custom_call.1} parent=0
    _
  %s9 = ssub.s32 1, %s7
  %s10 = scalar_select 0, %s9, %s7
  $region1: #{tpu_custom_call.1} parent=0
    #allocation2 [shape = 'u8[4096]{0}', space=vmem, size = 0x1000, scoped, tag = 'input window, operand 0, single buffered']
    #allocation3 [shape = 's32[1]{0}', space=sflag, size = 0x4, scoped, tag = 'scoped memory for tpu_custom_call.1']
    #allocation4 [shape = 's32[1]{0}', space=sflag, size = 0x4, scoped, tag = 'scoped memory for tpu_custom_call.1']
    #allocation5 [shape = 'u8[4096]{0}', space=vmem, size = 0x1000, scoped, tag = 'input window, operand 1, single buffered']
    #allocation6 [shape = 's32[1]{0}', space=sflag, size = 0x4, scoped, tag = 'scoped memory for tpu_custom_call.1']
    #allocation7 [shape = 'u8[4096]{0}', space=vmem, size = 0x1000, scoped, tag = 'output window, operand 0, single buffered']
    %11 = vsyncpa [#allocation3], 0
    %12 = vsyncpa [#allocation6], 0
    %13 = vsyncpa [#allocation4], 0
    // Predicated region
    $region2: #{tpu_custom_call.1} parent=1 // pred_check
      _
    $region3: #{tpu_custom_call.1} parent=1 // pred_check_branch
      %15 = sbr.rel (0) target = $region5
    $region4: #{tpu_custom_call.1} parent=1 // pred_region
      %s17 = ssub.s32 128, 128
      %18 = vsyncadd [#allocation3], %s17
      %s20 = sshll.u32 [#allocation2], 4
      %s21 = int_to_ptr.vmem [resolvable:$true] %s20
      %23 = dma.hbm_to_vmem [thread:$0]  %s0, 128, %s21, [#allocation3]
    $region5: #{tpu_custom_call.1} parent=1 // pred_fallthru
      _
    // Predicated region
    $region6: #{tpu_custom_call.1} parent=1 // pred_check
      _
    $region7: #{tpu_custom_call.1} parent=1 // pred_check_branch
      %25 = sbr.rel (0) target = $region9
    $region8: #{tpu_custom_call.1} parent=1 // pred_region
      %s27 = ssub.s32 128, 128
      %28 = vsyncadd [#allocation6], %s27
      %s29 = sshll.u32 [#allocation5], 4
      %s30 = int_to_ptr.vmem [resolvable:$true] %s29
      %35 = dma.hbm_to_vmem [thread:$0]  %s1, 128, %s30, [#allocation6], 64, 64, 4
    $region9: #{tpu_custom_call.1} parent=1 // pred_fallthru
      _
    // Predicated region
    $region10: #{tpu_custom_call.1} parent=1 // pred_check
      _
    $region11: #{tpu_custom_call.1} parent=1 // pred_check_branch
      %37 = sbr.rel (0) target = $region13
    $region12: #{tpu_custom_call.1} parent=1 // pred_region
      _
    $region13: #{tpu_custom_call.1} parent=1 // pred_fallthru
      _
    // Predicated region
    $region14: #{tpu_custom_call.1} parent=1 // pred_check
      _
    $region15: #{tpu_custom_call.1} parent=1 // pred_check_branch
      %39 = sbr.rel (0) target = $region17
    $region16: #{tpu_custom_call.1} parent=1 // pred_region
      _
    $region17: #{tpu_custom_call.1} parent=1 // pred_fallthru
      _
    // Predicated region
    $region18: #{tpu_custom_call.1} parent=1 // pred_check
      _
    $region19: #{tpu_custom_call.1} parent=1 // pred_check_branch
      %41 = sbr.rel (0) target = $region21
    $region20: #{tpu_custom_call.1} parent=1 // pred_region
      _
    $region21: #{tpu_custom_call.1} parent=1 // pred_fallthru
      _
    // Predicated region
    $region22: #{tpu_custom_call.1} parent=1 // pred_check
      _
    $region23: #{tpu_custom_call.1} parent=1 // pred_check_branch
      %43 = sbr.rel (0) target = $region25
    $region24: #{tpu_custom_call.1} parent=1 // pred_region
      _
    $region25: #{tpu_custom_call.1} parent=1 // pred_fallthru
      _
    // Predicated region
    $region26: #{tpu_custom_call.1} parent=1 // pred_check
      _
    $region27: #{tpu_custom_call.1} parent=1 // pred_check_branch
      %45 = sbr.rel (0) target = $region29
    $region28: #{tpu_custom_call.1} parent=1 // pred_region
      %46 = dma.done [#allocation3], 128
    $region29: #{tpu_custom_call.1} parent=1 // pred_fallthru
      _
    // Predicated region
    $region30: #{tpu_custom_call.1} parent=1 // pred_check
      _
    $region31: #{tpu_custom_call.1} parent=1 // pred_check_branch
      %48 = sbr.rel (0) target = $region33
    $region32: #{tpu_custom_call.1} parent=1 // pred_region
      %49 = dma.done [#allocation6], 128
    $region33: #{tpu_custom_call.1} parent=1 // pred_fallthru
      _
    %v51 = vld [vmem:[#allocation2] sm:$0xff]
    %v52 = vpack.c.bf16 %v51, %v51
    %v53 = vld [vmem:[%s4] sm:$0x3]
    %v54 = vld [vmem:[#allocation5] sm:$0xf]
    %v55 = vld [vmem:[#allocation5 + $0x4] sm:$0xf]
    %v56 = vlaneseq
    %v57 = vshrl.u32 %v56, 7
    %v58 = vsub.s32 0, %v57
    %v59 = vrot.slane %v53, %v58
    %v62 = vunpack.c.l.b16 %v54
    %v63 = vunpack.c.l.b16 %v55
    %v64 = vpack.c.b16 %v63, %v62
    %vm66 = vcmask 130048
    %v68 = vsel %vm66, %v52, 0
    %70 = vmatprep.subr.bf16.mxu0 0
    %71 = vmatpush1.bf16.msra.mxu0 0
    %72 = vmatprep.subr.bf16.mxu0 0
    %73 = vmatpush1.bf16.msra.mxu0 0
    %74 = vmatprep.subr.bf16.mxu0 0
    %75 = vmatpush1.bf16.msra.mxu0 0
    %76 = vmatprep.subr.bf16.mxu0 0
    %77 = vmatpush1.bf16.msra.mxu0 0
    %78 = vmatprep.subr.bf16.mxu0 0
    %79 = vmatpush1.bf16.msra.mxu0 0
    %80 = vmatprep.subr.bf16.mxu0 0
    %81 = vmatpush1.bf16.msra.mxu0 0
    %82 = vmatprep.subr.bf16.mxu0 0
    %83 = vmatpush1.bf16.msra.mxu0 0
    %84 = vmatprep.subr.bf16.mxu0 0
    %85 = vmatpush1.bf16.msra.mxu0 %v64
    %86 = vmatprep.subr.bf16.mxu0 0
    %87 = vmatpush2.bf16.msra.mxu0 0
    %88 = vmatprep.subr.bf16.mxu0 0
    %89 = vmatpush2.bf16.msra.mxu0 0
    %90 = vmatprep.subr.bf16.mxu0 0
    %91 = vmatpush2.bf16.msra.mxu0 0
    %92 = vmatprep.subr.bf16.mxu0 0
    %93 = vmatpush2.bf16.msra.mxu0 0
    %94 = vmatprep.subr.bf16.mxu0 0
    %95 = vmatpush2.bf16.msra.mxu0 0
    %96 = vmatprep.subr.bf16.mxu0 0
    %97 = vmatpush2.bf16.msra.mxu0 0
    %98 = vmatprep.subr.bf16.mxu0 0
    %99 = vmatpush2.bf16.msra.mxu0 0
    %100 = vmatprep.subr.bf16.mxu0 0
    %101 = vmatpush2.bf16.msra.mxu0 0
    %102 = vmatprep.mubr.bf16.mxu0 0
    %103 = vmatmul.mubr.bf16.gmra.mxu0 %v68
    %v104 = vpop.f32.mrf.mxu0
    %v105 = vadd.f32 %v59, %v104
    %v106 = vpop.f32.mrf.mxu0
    %v107 = vpop.f32.mrf.mxu0
    %v108 = vpop.f32.mrf.mxu0
    %109 = vdwg.mxu0
    %v110 = vmax.f32 %v105, 0.0
    %v111 = vpack.c.bf16 %v110, %v110
    %v112 = vld [vmem:[%s2] sm:$0xf]
    %v113 = vld [vmem:[%s2 + $0x4] sm:$0xf]
    %v114 = vld [vmem:[%s2 + $0x8] sm:$0xf]
    %v115 = vld [vmem:[%s2 + $0xc] sm:$0xf]
    %v116 = vld [vmem:[%s2 + $0x10] sm:$0xf]
    %v117 = vld [vmem:[%s2 + $0x14] sm:$0xf]
    %v118 = vld [vmem:[%s2 + $0x18] sm:$0xf]
    %v119 = vld [vmem:[%s2 + $0x1c] sm:$0xf]
    %v120 = vld [vmem:[%s2 + $0x20] sm:$0xf]
    %v121 = vld [vmem:[%s2 + $0x24] sm:$0xf]
    %v122 = vld [vmem:[%s2 + $0x28] sm:$0xf]
    %v123 = vld [vmem:[%s2 + $0x2c] sm:$0xf]
    %v124 = vld [vmem:[%s2 + $0x30] sm:$0xf]
    %v125 = vld [vmem:[%s2 + $0x34] sm:$0xf]
    %v126 = vld [vmem:[%s2 + $0x38] sm:$0xf]
    %v127 = vld [vmem:[%s2 + $0x3c] sm:$0xf]
    %v128 = vlaneseq
    %v129 = vshrl.u32 %v128, 7
    %v130 = vsub.s32 1, %v129
    %v131 = vrot.slane %v53, %v130
    %v148 = vunpack.c.l.b16 %v112
    %v149 = vunpack.c.l.b16 %v113
    %v150 = vunpack.c.l.b16 %v114
    %v151 = vunpack.c.l.b16 %v115
    %v152 = vunpack.c.l.b16 %v116
    %v153 = vunpack.c.l.b16 %v117
    %v154 = vunpack.c.l.b16 %v118
    %v155 = vunpack.c.l.b16 %v119
    %v156 = vunpack.c.l.b16 %v120
    %v157 = vunpack.c.l.b16 %v121
    %v158 = vunpack.c.l.b16 %v122
    %v159 = vunpack.c.l.b16 %v123
    %v160 = vunpack.c.l.b16 %v124
    %v161 = vunpack.c.l.b16 %v125
    %v162 = vunpack.c.l.b16 %v126
    %v163 = vunpack.c.l.b16 %v127
    %v164 = vpack.c.b16 %v149, %v148
    %v165 = vpack.c.b16 %v151, %v150
    %v166 = vpack.c.b16 %v153, %v152
    %v167 = vpack.c.b16 %v155, %v154
    %v168 = vpack.c.b16 %v157, %v156
    %v169 = vpack.c.b16 %v159, %v158
    %v170 = vpack.c.b16 %v161, %v160
    %v171 = vpack.c.b16 %v163, %v162
    %180 = vmatprep.subr.bf16.mxu0 0
    %181 = vmatpush1.bf16.msra.mxu0 %v171
    %182 = vmatprep.subr.bf16.mxu0 0
    %183 = vmatpush1.bf16.msra.mxu0 %v170
    %184 = vmatprep.subr.bf16.mxu0 0
    %185 = vmatpush1.bf16.msra.mxu0 %v169
    %186 = vmatprep.subr.bf16.mxu0 0
    %187 = vmatpush1.bf16.msra.mxu0 %v168
    %188 = vmatprep.subr.bf16.mxu0 0
    %189 = vmatpush1.bf16.msra.mxu0 %v167
    %190 = vmatprep.subr.bf16.mxu0 0
    %191 = vmatpush1.bf16.msra.mxu0 %v166
    %192 = vmatprep.subr.bf16.mxu0 0
    %193 = vmatpush1.bf16.msra.mxu0 %v165
    %194 = vmatprep.subr.bf16.mxu0 0
    %195 = vmatpush1.bf16.msra.mxu0 %v164
    %196 = vmatprep.subr.bf16.mxu0 0
    %197 = vmatpush2.bf16.msra.mxu0 0
    %198 = vmatprep.subr.bf16.mxu0 0
    %199 = vmatpush2.bf16.msra.mxu0 0
    %200 = vmatprep.subr.bf16.mxu0 0
    %201 = vmatpush2.bf16.msra.mxu0 0
    %202 = vmatprep.subr.bf16.mxu0 0
    %203 = vmatpush2.bf16.msra.mxu0 0
    %204 = vmatprep.subr.bf16.mxu0 0
    %205 = vmatpush2.bf16.msra.mxu0 0
    %206 = vmatprep.subr.bf16.mxu0 0
    %207 = vmatpush2.bf16.msra.mxu0 0
    %208 = vmatprep.subr.bf16.mxu0 0
    %209 = vmatpush2.bf16.msra.mxu0 0
    %210 = vmatprep.subr.bf16.mxu0 0
    %211 = vmatpush2.bf16.msra.mxu0 0
    %212 = vmatprep.mubr.bf16.mxu0 0
    %213 = vmatmul.mubr.bf16.gmra.mxu0 %v111
    %v214 = vpop.f32.mrf.mxu0
    %v215 = vadd.f32 %v131, %v214
    %v216 = vpop.f32.mrf.mxu0
    %v217 = vpop.f32.mrf.mxu0
    %v218 = vpop.f32.mrf.mxu0
    %219 = vdwg.mxu0
    %v220 = vmax.f32 %v215, 0.0
    %v221 = vpack.c.bf16 %v220, %v220
    %v222 = vld [vmem:[%s3] sm:$0xf]
    %v223 = vld [vmem:[%s3 + $0x4] sm:$0xf]
    %v224 = vld [vmem:[%s3 + $0x8] sm:$0xf]
    %v225 = vld [vmem:[%s3 + $0xc] sm:$0xf]
    %v226 = vld [vmem:[%s3 + $0x10] sm:$0xf]
    %v227 = vld [vmem:[%s3 + $0x14] sm:$0xf]
    %v228 = vld [vmem:[%s3 + $0x18] sm:$0xf]
    %v229 = vld [vmem:[%s3 + $0x1c] sm:$0xf]
    %v230 = vld [vmem:[%s3 + $0x20] sm:$0xf]
    %v231 = vld [vmem:[%s3 + $0x24] sm:$0xf]
    %v232 = vld [vmem:[%s3 + $0x28] sm:$0xf]
    %v233 = vld [vmem:[%s3 + $0x2c] sm:$0xf]
    %v234 = vld [vmem:[%s3 + $0x30] sm:$0xf]
    %v235 = vld [vmem:[%s3 + $0x34] sm:$0xf]
    %v236 = vld [vmem:[%s3 + $0x38] sm:$0xf]
    %v237 = vld [vmem:[%s3 + $0x3c] sm:$0xf]
    %v238 = vld [vmem:[%s5] sm:$0x1]
    %v240 = vlaneseq
    %v241 = vshrl.u32 %v240, 7
    %v242 = vsub.s32 0, %v241
    %v243 = vrot.slane %v238, %v242
    %v261 = vunpack.c.l.b16 %v222
    %v262 = vunpack.c.l.b16 %v223
    %v263 = vunpack.c.l.b16 %v224
    %v264 = vunpack.c.l.b16 %v225
    %v265 = vunpack.c.l.b16 %v226
    %v266 = vunpack.c.l.b16 %v227
    %v267 = vunpack.c.l.b16 %v228
    %v268 = vunpack.c.l.b16 %v229
    %v269 = vunpack.c.l.b16 %v230
    %v270 = vunpack.c.l.b16 %v231
    %v271 = vunpack.c.l.b16 %v232
    %v272 = vunpack.c.l.b16 %v233
    %v273 = vunpack.c.l.b16 %v234
    %v274 = vunpack.c.l.b16 %v235
    %v275 = vunpack.c.l.b16 %v236
    %v276 = vunpack.c.l.b16 %v237
    %v277 = vpack.c.b16 %v262, %v261
    %v278 = vpack.c.b16 %v264, %v263
    %v279 = vpack.c.b16 %v266, %v265
    %v280 = vpack.c.b16 %v268, %v267
    %v281 = vpack.c.b16 %v270, %v269
    %v282 = vpack.c.b16 %v272, %v271
    %v283 = vpack.c.b16 %v274, %v273
    %v284 = vpack.c.b16 %v276, %v275
    %293 = vmatprep.subr.bf16.mxu0 0
    %294 = vmatpush1.bf16.msra.mxu0 %v284
    %295 = vmatprep.subr.bf16.mxu0 0
    %296 = vmatpush1.bf16.msra.mxu0 %v283
    %297 = vmatprep.subr.bf16.mxu0 0
    %298 = vmatpush1.bf16.msra.mxu0 %v282
    %299 = vmatprep.subr.bf16.mxu0 0
    %300 = vmatpush1.bf16.msra.mxu0 %v281
    %301 = vmatprep.subr.bf16.mxu0 0
    %302 = vmatpush1.bf16.msra.mxu0 %v280
    %303 = vmatprep.subr.bf16.mxu0 0
    %304 = vmatpush1.bf16.msra.mxu0 %v279
    %305 = vmatprep.subr.bf16.mxu0 0
    %306 = vmatpush1.bf16.msra.mxu0 %v278
    %307 = vmatprep.subr.bf16.mxu0 0
    %308 = vmatpush1.bf16.msra.mxu0 %v277
    %309 = vmatprep.subr.bf16.mxu0 0
    %310 = vmatpush2.bf16.msra.mxu0 0
    %311 = vmatprep.subr.bf16.mxu0 0
    %312 = vmatpush2.bf16.msra.mxu0 0
    %313 = vmatprep.subr.bf16.mxu0 0
    %314 = vmatpush2.bf16.msra.mxu0 0
    %315 = vmatprep.subr.bf16.mxu0 0
    %316 = vmatpush2.bf16.msra.mxu0 0
    %317 = vmatprep.subr.bf16.mxu0 0
    %318 = vmatpush2.bf16.msra.mxu0 0
    %319 = vmatprep.subr.bf16.mxu0 0
    %320 = vmatpush2.bf16.msra.mxu0 0
    %321 = vmatprep.subr.bf16.mxu0 0
    %322 = vmatpush2.bf16.msra.mxu0 0
    %323 = vmatprep.subr.bf16.mxu0 0
    %324 = vmatpush2.bf16.msra.mxu0 0
    %325 = vmatprep.mubr.bf16.mxu0 0
    %326 = vmatmul.mubr.bf16.gmra.mxu0 %v221
    %v327 = vpop.f32.mrf.mxu0
    %v328 = vadd.f32 %v243, %v327
    %v329 = vpop.f32.mrf.mxu0
    %v330 = vpop.f32.mrf.mxu0
    %v331 = vpop.f32.mrf.mxu0
    %332 = vdwg.mxu0
    %vm333 = vcmask 64512
    %334 = vst.msk [vmem:[#allocation7] sm:$0xff] %vm333, %v328
    // Predicated region
    $region34: #{tpu_custom_call.1} parent=1 // pred_check
      _
    $region35: #{tpu_custom_call.1} parent=1 // pred_check_branch
      %336 = sbr.rel (0) target = $region37
    $region36: #{tpu_custom_call.1} parent=1 // pred_region
      %s338 = ssub.s32 128, 128
      %339 = vsyncadd [#allocation4], %s338
      %s341 = sshll.u32 [#allocation7], 4
      %s342 = int_to_ptr.vmem [resolvable:$true] %s341
      %344 = dma.vmem_to_hbm [thread:$0]  %s342, 128, %s6, [#allocation4]
    $region37: #{tpu_custom_call.1} parent=1 // pred_fallthru
      _
    // Predicated region
    $region38: #{tpu_custom_call.1} parent=1 // pred_check
      _
    $region39: #{tpu_custom_call.1} parent=1 // pred_check_branch
      %346 = sbr.rel (0) target = $region41
    $region40: #{tpu_custom_call.1} parent=1 // pred_region
      %347 = dma.done [#allocation4], 128
    $region41: #{tpu_custom_call.1} parent=1 // pred_fallthru
      _
    %348 = vsyncpa [#allocation3], 1
    %349 = vsyncpa [#allocation6], 1
    %350 = vsyncpa [#allocation4], 1

</llo_original>
